<compile_context>
chip_gen: v5e
topology: v5e:2x2
jax: 0.10.0
libtpu: 0.0.40
codegen_flags: <defaults>
</compile_context>

<pallas_src>
import functools

import jax
import jax.numpy as jnp
from jax import lax
from jax.experimental import pallas as pl
from jax.experimental.pallas import tpu as pltpu

DELTA = 1e-6  # LayerNorm "delta" added to the std (NOT to the variance), per the PyTorch module.


def _round_up(a, m):
    return ((a + m - 1) // m) * m


def _residual_kernel(x_ref, params_ref, w_ref, o_ref, *, dim, d_pad):
    # x_ref:      (tile_n, d_pad) rows of the flattened (padded) input
    # params_ref: (3, d_pad) f32 rows = [LayerNorm gain; LayerNorm bias; Linear bias]
    # w_ref:      (d_pad, d_pad) Linear weight, resident in VMEM (native dtype, e.g. bf16)
    x = x_ref[...].astype(jnp.float32)

    # ---- LayerNorm (torch.std => unbiased ddof=1; delta added to std) ----
    mean = jnp.sum(x, axis=-1, keepdims=True) * (1.0 / dim)   # padded cols are 0 -> sum/dim correct
    centered = x - mean
    if d_pad != dim:
        # zero out the padded feature columns so the variance sum is exact
        col = lax.broadcasted_iota(jnp.int32, x.shape, 1)
        centered = jnp.where(col < dim, centered, 0.0)
    var = jnp.sum(centered * centered, axis=-1, keepdims=True) * (1.0 / (dim - 1))
    std = jnp.sqrt(var) + DELTA
    inv_std = pl.reciprocal(std, approx=True)                 # (tile_n, 1): per-row, EUP slot

    gain = params_ref[0:1, :]                                 # (1, d_pad) f32, zero-padded
    beta = params_ref[1:2, :]                                 # (1, d_pad) f32, zero-padded
    lin_bias = params_ref[2:3, :]                             # (1, d_pad) f32, zero-padded
    normed = centered * inv_std * gain + beta                 # f32; padded cols stay 0

    # ---- sublayer: Linear(D, D) on the MXU; operands in weight dtype, f32 accumulate ----
    w = w_ref[...]
    sub = jnp.dot(normed.astype(w.dtype), w, preferred_element_type=jnp.float32) + lin_bias

    # ---- dropout (eval mode: identity) + residual add ----
    o_ref[...] = (x + sub).astype(o_ref.dtype)


def residual_connection(x, gain, beta, w, b, *, tile_n=256):
    """x: [B, S, D]. Returns x + Linear(LayerNorm(x)) with one fused Pallas kernel.

    tile_n default (256) targets v6e/v7x; use 128-256 on v5e. It is automatically capped
    by the row count and by a v7x-safe VMEM budget.
    """
    B, S, D = x.shape
    N = B * S

    d_pad = _round_up(max(D, 128), 128)          # lane-dense feature dim
    tile_n = max(8, min(tile_n, _round_up(N, 8)))

    x_bytes = jnp.dtype(x.dtype).itemsize
    w_bytes = jnp.dtype(w.dtype).itemsize

    def _vmem_estimate(tn):
        return (2 * d_pad * d_pad * w_bytes       # resident weight (double-buffer accounting)
                + 2 * 3 * d_pad * 4               # gain/beta/bias
                + 4 * tn * d_pad * x_bytes)       # x tile + out tile, double-buffered

    # keep the working set under a v7x-safe budget (64 MiB/TC physical)
    while tile_n > 8 and _vmem_estimate(tile_n) > (40 << 20):
        tile_n = max(8, _round_up(tile_n // 2, 8))

    n_tiles = pl.cdiv(N, tile_n)
    n_pad = n_tiles * tile_n

    x2 = x.reshape(N, D)
    if (n_pad, d_pad) != (N, D):
        x2 = jnp.pad(x2, ((0, n_pad - N), (0, d_pad - D)))
    params = jnp.stack([gain.astype(jnp.float32),
                        beta.astype(jnp.float32),
                        b.astype(jnp.float32)])   # (3, D)
    if d_pad != D:
        params = jnp.pad(params, ((0, 0), (0, d_pad - D)))
        w = jnp.pad(w, ((0, d_pad - D), (0, d_pad - D)))

    vmem_limit = int(min(max(2 * _vmem_estimate(tile_n) + (4 << 20), 32 << 20), 64 << 20))

    kernel = functools.partial(_residual_kernel, dim=D, d_pad=d_pad)

    out = pl.pallas_call(
        kernel,
        out_shape=jax.ShapeDtypeStruct((n_pad, d_pad), x.dtype),
        grid_spec=pltpu.PrefetchScalarGridSpec(
            num_scalar_prefetch=0,
            grid=(n_tiles,),
            in_specs=[
                pl.BlockSpec((tile_n, d_pad), lambda i: (i, 0)),   # x rows (streamed)
                pl.BlockSpec((3, d_pad), lambda i: (0, 0)),        # gain/beta/bias (resident)
                pl.BlockSpec((d_pad, d_pad), lambda i: (0, 0)),    # Linear weight (resident)
            ],
            out_specs=pl.BlockSpec((tile_n, d_pad), lambda i: (i, 0)),
        ),
        compiler_params=pltpu.CompilerParams(
            dimension_semantics=("parallel",),
            vmem_limit_bytes=vmem_limit),
    )(x2, params, w)

    return out[:N, :D].reshape(B, S, D)


def _reference(x, gain, beta, w, b):
    xf = x.astype(jnp.float32)
    mean = jnp.mean(xf, axis=-1, keepdims=True)
    centered = xf - mean
    var = jnp.sum(centered * centered, axis=-1, keepdims=True) / (x.shape[-1] - 1)
    std = jnp.sqrt(var) + DELTA
    normed = gain.astype(jnp.float32) / std * centered + beta.astype(jnp.float32)
    sub = jnp.dot(normed, w.astype(jnp.float32),
                  precision=jax.lax.Precision.HIGHEST) + b.astype(jnp.float32)
    return (xf + sub).astype(x.dtype)


if __name__ == "__main__":
    key = jax.random.PRNGKey(0)

    def make_case(k, B, S, D, dtype):
        kx, kw, kb, kg, kbe = jax.random.split(k, 5)
        x = jax.random.normal(kx, (B, S, D), dtype=jnp.float32).astype(dtype)
        gain = 1.0 + 0.1 * jax.random.normal(kg, (D,), dtype=jnp.float32)
        beta = 0.1 * jax.random.normal(kbe, (D,), dtype=jnp.float32)
        w = (jax.random.normal(kw, (D, D), dtype=jnp.float32) / jnp.sqrt(D)).astype(dtype)
        b = 0.01 * jax.random.normal(kb, (D,), dtype=jnp.float32)
        return x, gain, beta, w, b

    k1, k2 = jax.random.split(key)

    # Case A: lane-dense D=128, bf16 activations/weights (MXU-native), f32 accumulation.
    xa, ga, bea, wa, ba = make_case(k1, 2, 8, 128, jnp.bfloat16)
    out_a = jax.block_until_ready(residual_connection(xa, ga, bea, wa, ba))
    ref_a = _reference(xa, ga, bea, wa, ba)
    assert out_a.shape == (2, 8, 128)
    assert jnp.allclose(out_a.astype(jnp.float32), ref_a.astype(jnp.float32),
                        atol=1e-1, rtol=5e-2), "bf16 case mismatch vs reference"

    # Case B: small/odd shapes (N=15, D=32), f32 — exercises the row + lane padding path.
    # Tolerance accounts for the EUP approximate reciprocal and MXU accumulation order.
    xb, gb, beb, wb, bb = make_case(k2, 3, 5, 32, jnp.float32)
    out_b = jax.block_until_ready(residual_connection(xb, gb, beb, wb, bb))
    ref_b = _reference(xb, gb, beb, wb, bb)
    assert out_b.shape == (3, 5, 32)
    assert jnp.allclose(out_b, ref_b, atol=3e-2, rtol=3e-2), "f32 case mismatch vs reference"

    print("KERNEL_OK")
</pallas_src>

<mosaic_0001>
module attributes {stable_mosaic.version = 11 : i64} {
  func.func @_residual_kernel(%arg0: i32, %arg1: memref<16x128xbf16, #tpu.memory_space<vmem>>, %arg2: memref<3x128xf32, #tpu.memory_space<vmem>>, %arg3: memref<128x128xbf16, #tpu.memory_space<vmem>>, %arg4: memref<16x128xbf16, #tpu.memory_space<vmem>>) attributes {dimension_semantics = [#tpu.dimension_semantics<parallel>], iteration_bounds = array<i64: 1>, scalar_prefetch = 0 : i64, scratch_operands = 0 : i64, tpu.core_type = #tpu.core_type<tc>, window_params = [{transform_indices = @transform_0, window_bounds = array<i64: 16, 128>}, {pipeline_mode = #tpu.pipeline_mode<synchronous>, transform_indices = @transform_1, window_bounds = array<i64: 3, 128>}, {pipeline_mode = #tpu.pipeline_mode<synchronous>, transform_indices = @transform_2, window_bounds = array<i64: 128, 128>}, {transform_indices = @transform_3, window_bounds = array<i64: 16, 128>}]} {
    %c0 = arith.constant 0 : index
    %c0_0 = arith.constant 0 : index
    %0 = vector.load %arg1[%c0, %c0_0] : memref<16x128xbf16, #tpu.memory_space<vmem>>, vector<16x128xbf16>
    %1 = arith.extf %0 : vector<16x128xbf16> to vector<16x128xf32>
    %cst = arith.constant dense<0.000000e+00> : vector<16xf32>
    %2 = vector.multi_reduction <add>, %1, %cst [1] : vector<16x128xf32> to vector<16xf32>
    %3 = vector.shape_cast %2 : vector<16xf32> to vector<16x1xf32>
    %cst_1 = arith.constant 7.812500e-03 : f32
    %4 = vector.broadcast %cst_1 : f32 to vector<16x1xf32>
    %5 = arith.mulf %3, %4 : vector<16x1xf32>
    %6 = vector.broadcast %5 : vector<16x1xf32> to vector<16x128xf32>
    %7 = arith.subf %1, %6 : vector<16x128xf32>
    %8 = arith.mulf %7, %7 : vector<16x128xf32>
    %cst_2 = arith.constant dense<0.000000e+00> : vector<16xf32>
    %9 = vector.multi_reduction <add>, %8, %cst_2 [1] : vector<16x128xf32> to vector<16xf32>
    %10 = vector.shape_cast %9 : vector<16xf32> to vector<16x1xf32>
    %cst_3 = arith.constant 0.00787401571 : f32
    %11 = vector.broadcast %cst_3 : f32 to vector<16x1xf32>
    %12 = arith.mulf %10, %11 : vector<16x1xf32>
    %13 = math.sqrt %12 : vector<16x1xf32>
    %cst_4 = arith.constant 9.99999997E-7 : f32
    %14 = vector.broadcast %cst_4 : f32 to vector<16x1xf32>
    %15 = arith.addf %13, %14 : vector<16x1xf32>
    %16 = tpu.reciprocal %15 {approx = true} : vector<16x1xf32> -> vector<16x1xf32>
    %c0_5 = arith.constant 0 : index
    %c0_6 = arith.constant 0 : index
    %17 = vector.load %arg2[%c0_5, %c0_6] : memref<3x128xf32, #tpu.memory_space<vmem>>, vector<1x128xf32>
    %c1 = arith.constant 1 : index
    %c0_7 = arith.constant 0 : index
    %18 = vector.load %arg2[%c1, %c0_7] : memref<3x128xf32, #tpu.memory_space<vmem>>, vector<1x128xf32>
    %c2 = arith.constant 2 : index
    %c0_8 = arith.constant 0 : index
    %19 = vector.load %arg2[%c2, %c0_8] : memref<3x128xf32, #tpu.memory_space<vmem>>, vector<1x128xf32>
    %20 = vector.broadcast %16 : vector<16x1xf32> to vector<16x128xf32>
    %21 = arith.mulf %7, %20 : vector<16x128xf32>
    %22 = vector.broadcast %17 : vector<1x128xf32> to vector<16x128xf32>
    %23 = arith.mulf %21, %22 : vector<16x128xf32>
    %24 = vector.broadcast %18 : vector<1x128xf32> to vector<16x128xf32>
    %25 = arith.addf %23, %24 : vector<16x128xf32>
    %c0_9 = arith.constant 0 : index
    %c0_10 = arith.constant 0 : index
    %26 = vector.load %arg3[%c0_9, %c0_10] : memref<128x128xbf16, #tpu.memory_space<vmem>>, vector<128x128xbf16>
    %27 = arith.truncf %25 : vector<16x128xf32> to vector<16x128xbf16>
    %cst_11 = arith.constant dense<0.000000e+00> : vector<16x128xf32>
    %28 = tpu.matmul %27, %26, %cst_11 {dimension_numbers = #tpu.dot_dimension_numbers<[1], [0], [0], [1], [0, 0, 1, 1], [], []>} : vector<16x128xbf16>, vector<128x128xbf16>, vector<16x128xf32> -> vector<16x128xf32>
    %29 = vector.broadcast %19 : vector<1x128xf32> to vector<16x128xf32>
    %30 = arith.addf %28, %29 : vector<16x128xf32>
    %31 = arith.addf %1, %30 : vector<16x128xf32>
    %32 = arith.truncf %31 : vector<16x128xf32> to vector<16x128xbf16>
    %c0_12 = arith.constant 0 : index
    %c0_13 = arith.constant 0 : index
    %33 = vector.load %arg4[%c0_12, %c0_13] : memref<16x128xbf16, #tpu.memory_space<vmem>>, vector<16x128xbf16>
    tpu.vector_store %arg4[%c0_12, %c0_13], %32 {strides = array<i32>} : memref<16x128xbf16, #tpu.memory_space<vmem>>, vector<16x128xbf16>,
    return
  }
  func.func @transform_0(%arg0: i32) -> (i32, i32) {
    %c0_i32 = arith.constant 0 : i32
    %c0_i32_0 = arith.constant 0 : i32
    return %arg0, %c0_i32 : i32, i32
  }
  func.func @transform_1(%arg0: i32) -> (i32, i32) {
    %c0_i32 = arith.constant 0 : i32
    %c0_i32_0 = arith.constant 0 : i32
    %c0_i32_1 = arith.constant 0 : i32
    return %c0_i32, %c0_i32_0 : i32, i32
  }
  func.func @transform_2(%arg0: i32) -> (i32, i32) {
    %c0_i32 = arith.constant 0 : i32
    %c0_i32_0 = arith.constant 0 : i32
    %c0_i32_1 = arith.constant 0 : i32
    return %c0_i32, %c0_i32_0 : i32, i32
  }
  func.func @transform_3(%arg0: i32) -> (i32, i32) {
    %c0_i32 = arith.constant 0 : i32
    %c0_i32_0 = arith.constant 0 : i32
    return %arg0, %c0_i32 : i32, i32
  }
}

</mosaic_0001>

<llo_original>
// kernel: tpu_custom_call.1
$region0: #{tpu_custom_call.1}
  #allocation0 [shape = 'u32[]', space=smem, size = 0x4, offset = 0x4, fixed_abs, tag = 'smem constant byte address 0x4 - core index']
  #allocation1 [shape = 'u32[72,128]{1,0:T(1,128)}', space=vmem, size = 0x9000, scoped, tag = 'internal scratch']
  %s0 = inlined_call_operand.hbm [shape: bf16[16,128], index: 0, kind: input, shape index: {}]
  %s1 = inlined_call_operand.hbm [shape: f32[3,128], index: 1, kind: input, shape index: {}]
  %s2 = inlined_call_operand.hbm [shape: bf16[128,128], index: 2, kind: input, shape index: {}]
  %s3 = inlined_call_operand.hbm [shape: bf16[16,128], index: 3, kind: output, shape index: {}]
  %s4 = sld [smem:[#allocation0]]
  $region34: #{tpu_custom_call.1} parent=0
    _
  %s6 = ssub.s32 1, %s4
  %s7 = scalar_select 0, %s6, %s4
  $region1: #{tpu_custom_call.1} parent=0
    #allocation2 [shape = 'u8[4096]{0}', space=vmem, size = 0x1000, scoped, tag = 'input window, operand 0, single buffered']
    #allocation3 [shape = 's32[1]{0}', space=sflag, size = 0x4, scoped, tag = 'scoped memory for tpu_custom_call.1']
    #allocation4 [shape = 's32[1]{0}', space=sflag, size = 0x4, scoped, tag = 'scoped memory for tpu_custom_call.1']
    #allocation5 [shape = 'u8[2048]{0}', space=vmem, size = 0x800, scoped, tag = 'input window, operand 1, single buffered']
    #allocation6 [shape = 's32[1]{0}', space=sflag, size = 0x4, scoped, tag = 'scoped memory for tpu_custom_call.1']
    #allocation7 [shape = 'u8[32768]{0}', space=vmem, size = 0x8000, scoped, tag = 'input window, operand 2, single buffered']
    #allocation8 [shape = 'u8[4096]{0}', space=vmem, size = 0x1000, scoped, tag = 'output window, operand 0, single buffered']
    %8 = vsyncpa [#allocation3], 0
    %9 = vsyncpa [#allocation6], 0
    %10 = vsyncpa [#allocation4], 0
    // Predicated region
    $region2: #{tpu_custom_call.1} parent=1 // pred_check
      _
    $region3: #{tpu_custom_call.1} parent=1 // pred_check_branch
      %12 = sbr.rel (0) target = $region5
    $region4: #{tpu_custom_call.1} parent=1 // pred_region
      %14 = vsyncadd [#allocation3], 0
      %s15 = sshll.u32 %s0, 4
      %s16 = int_to_ptr.hbm [resolvable:$true] %s15
      %s17 = sshll.u32 [#allocation2], 4
      %s18 = int_to_ptr.vmem [resolvable:$true] %s17
      %23 = dma.hbm_to_vmem [thread:$0]  %s16, 128, %s18, [#allocation3], 64, 64, 4
    $region5: #{tpu_custom_call.1} parent=1 // pred_fallthru
      _
    // Predicated region
    $region6: #{tpu_custom_call.1} parent=1 // pred_check
      _
    $region7: #{tpu_custom_call.1} parent=1 // pred_check_branch
      %25 = sbr.rel (0) target = $region9
    $region8: #{tpu_custom_call.1} parent=1 // pred_region
      %27 = vsyncadd [#allocation6], 0
      %s29 = sshll.u32 %s1, 4
      %s30 = int_to_ptr.hbm [resolvable:$true] %s29
      %s31 = sshll.u32 [#allocation5], 4
      %s32 = int_to_ptr.vmem [resolvable:$true] %s31
      %34 = dma.hbm_to_vmem [thread:$0]  %s30, 64, %s32, [#allocation6]
    $region9: #{tpu_custom_call.1} parent=1 // pred_fallthru
      _
    // Predicated region
    $region10: #{tpu_custom_call.1} parent=1 // pred_check
      _
    $region11: #{tpu_custom_call.1} parent=1 // pred_check_branch
      %36 = sbr.rel (0) target = $region13
    $region12: #{tpu_custom_call.1} parent=1 // pred_region
      %38 = vsyncadd [#allocation6], 0
      %s39 = sshll.u32 %s2, 4
      %s40 = int_to_ptr.hbm [resolvable:$true] %s39
      %s41 = sshll.u32 [#allocation7], 4
      %s42 = int_to_ptr.vmem [resolvable:$true] %s41
      %47 = dma.hbm_to_vmem [thread:$0]  %s40, 1024, %s42, [#allocation6], 64, 64, 4
    $region13: #{tpu_custom_call.1} parent=1 // pred_fallthru
      _
    // Predicated region
    $region14: #{tpu_custom_call.1} parent=1 // pred_check
      _
    $region15: #{tpu_custom_call.1} parent=1 // pred_check_branch
      %49 = sbr.rel (0) target = $region17
    $region16: #{tpu_custom_call.1} parent=1 // pred_region
      %51 = dma.done [#allocation3], 128
    $region17: #{tpu_custom_call.1} parent=1 // pred_fallthru
      _
    // Predicated region
    $region18: #{tpu_custom_call.1} parent=1 // pred_check
      _
    $region19: #{tpu_custom_call.1} parent=1 // pred_check_branch
      %53 = sbr.rel (0) target = $region21
    $region20: #{tpu_custom_call.1} parent=1 // pred_region
      %55 = dma.done [#allocation6], 64
    $region21: #{tpu_custom_call.1} parent=1 // pred_fallthru
      _
    // Predicated region
    $region22: #{tpu_custom_call.1} parent=1 // pred_check
      _
    $region23: #{tpu_custom_call.1} parent=1 // pred_check_branch
      %57 = sbr.rel (0) target = $region25
    $region24: #{tpu_custom_call.1} parent=1 // pred_region
      %59 = dma.done [#allocation6], 1024
    $region25: #{tpu_custom_call.1} parent=1 // pred_fallthru
      _
    %v60 = vld [vmem:[#allocation2] sm:$0xf]
    %v61 = vld [vmem:[#allocation2 + $0x4] sm:$0xf]
    %v62 = vunpack.c.l.bf16 %v60
    %v63 = vunpack.c.l.bf16 %v61
    %64 = vadd.xlane.f32.xlu0 %v62
    %v65 = vpop.xlane.xlu0 %64
    %66 = vadd.xlane.f32.xlu0 %v63
    %v67 = vpop.xlane.xlu0 %66
    %v68 = vmul.f32 %v65, 0.0078125
    %v69 = vmul.f32 %v67, 0.0078125
    %v70 = vsub.f32 %v62, %v68
    %v71 = vsub.f32 %v63, %v69
    %v72 = vmul.f32 %v70, %v70
    %v73 = vmul.f32 %v71, %v71
    %74 = vadd.xlane.f32.xlu0 %v72
    %v75 = vpop.xlane.xlu0 %74
    %76 = vadd.xlane.f32.xlu0 %v73
    %v77 = vpop.xlane.xlu0 %76
    %v78 = vmul.f32 %v75, 0.007874016
    %v79 = vmul.f32 %v77, 0.007874016
    %v80 = vrsqrt.pop %v78
    %v81 = vmul.f32 %v80, %v78
    %v82 = vmul.f32 %v81, %v80
    %v83 = vmul.f32 0.5, %v82
    %v84 = vsub.f32 1.5, %v83
    %v85 = vmul.f32 %v80, %v84
    %v86 = vmul.f32 %v78, %v85
    %vm87 = vcmp.eq.f32.partialorder %v78, inf
    %v88 = vsel %vm87, %v78, %v86
    %vm89 = vcmp.eq.f32.partialorder %v78, 0.0
    %v90 = vand.u32 %v78, 2147483648
    %v91 = vsel %vm89, %v90, %v88
    %v92 = vrsqrt.pop %v79
    %v93 = vmul.f32 %v92, %v79
    %v94 = vmul.f32 %v93, %v92
    %v95 = vmul.f32 0.5, %v94
    %v96 = vsub.f32 1.5, %v95
    %v97 = vmul.f32 %v92, %v96
    %v98 = vmul.f32 %v79, %v97
    %vm99 = vcmp.eq.f32.partialorder %v79, inf
    %v100 = vsel %vm99, %v79, %v98
    %vm101 = vcmp.eq.f32.partialorder %v79, 0.0
    %v102 = vand.u32 %v79, 2147483648
    %v103 = vsel %vm101, %v102, %v100
    %v104 = vadd.f32 %v91, 1e-06
    %v105 = vadd.f32 %v103, 1e-06
    %v106 = vrcp.pop %v104
    %v107 = vrcp.pop %v105
    %v108 = vld [vmem:[#allocation5] sm:$0x1]
    %v109 = vld [vmem:[#allocation5 + $0x1] sm:$0x1]
    %v110 = vld [vmem:[#allocation5 + $0x2] sm:$0x1]
    %v111 = vmul.f32 %v70, %v106
    %v112 = vmul.f32 %v71, %v107
    %v113 = vperm.slane %v108, 0
    %v114 = vmul.f32 %v111, %v113
    %v115 = vmul.f32 %v112, %v113
    %v116 = vperm.slane %v109, 0
    %v117 = vadd.f32 %v114, %v116
    %v118 = vadd.f32 %v115, %v116
    %v119 = vld [vmem:[#allocation7] sm:$0xf]
    %v120 = vld [vmem:[#allocation7 + $0x4] sm:$0xf]
    %v121 = vld [vmem:[#allocation7 + $0x8] sm:$0xf]
    %v122 = vld [vmem:[#allocation7 + $0xc] sm:$0xf]
    %v123 = vld [vmem:[#allocation7 + $0x10] sm:$0xf]
    %v124 = vld [vmem:[#allocation7 + $0x14] sm:$0xf]
    %v125 = vld [vmem:[#allocation7 + $0x18] sm:$0xf]
    %v126 = vld [vmem:[#allocation7 + $0x1c] sm:$0xf]
    %v127 = vld [vmem:[#allocation7 + $0x20] sm:$0xf]
    %v128 = vld [vmem:[#allocation7 + $0x24] sm:$0xf]
    %v129 = vld [vmem:[#allocation7 + $0x28] sm:$0xf]
    %v130 = vld [vmem:[#allocation7 + $0x2c] sm:$0xf]
    %v131 = vld [vmem:[#allocation7 + $0x30] sm:$0xf]
    %v132 = vld [vmem:[#allocation7 + $0x34] sm:$0xf]
    %v133 = vld [vmem:[#allocation7 + $0x38] sm:$0xf]
    %v134 = vld [vmem:[#allocation7 + $0x3c] sm:$0xf]
    %v135 = vpack.c.bf16 %v118, %v117
    %v136 = vperm.slane %v110, 0
    %v153 = vunpack.c.l.b16 %v119
    %v154 = vunpack.c.l.b16 %v120
    %v155 = vunpack.c.l.b16 %v121
    %v156 = vunpack.c.l.b16 %v122
    %v157 = vunpack.c.l.b16 %v123
    %v158 = vunpack.c.l.b16 %v124
    %v159 = vunpack.c.l.b16 %v125
    %v160 = vunpack.c.l.b16 %v126
    %v161 = vunpack.c.l.b16 %v127
    %v162 = vunpack.c.l.b16 %v128
    %v163 = vunpack.c.l.b16 %v129
    %v164 = vunpack.c.l.b16 %v130
    %v165 = vunpack.c.l.b16 %v131
    %v166 = vunpack.c.l.b16 %v132
    %v167 = vunpack.c.l.b16 %v133
    %v168 = vunpack.c.l.b16 %v134
    %v169 = vpack.c.b16 %v154, %v153
    %v170 = vpack.c.b16 %v156, %v155
    %v171 = vpack.c.b16 %v158, %v157
    %v172 = vpack.c.b16 %v160, %v159
    %v173 = vpack.c.b16 %v162, %v161
    %v174 = vpack.c.b16 %v164, %v163
    %v175 = vpack.c.b16 %v166, %v165
    %v176 = vpack.c.b16 %v168, %v167
    %185 = vmatpush.bf16.msra.mxu0 %v176
    %186 = vmatpush.bf16.msra.mxu0 %v175
    %187 = vmatpush.bf16.msra.mxu0 %v174
    %188 = vmatpush.bf16.msra.mxu0 %v173
    %189 = vmatpush.bf16.msra.mxu0 %v172
    %190 = vmatpush.bf16.msra.mxu0 %v171
    %191 = vmatpush.bf16.msra.mxu0 %v170
    %192 = vmatpush.bf16.msra.mxu0 %v169
    %193 = vmatmul.bf16.gmra.mxu0 %v135
    %v194 = vpop.f32.mrf.mxu0
    %v195 = vadd.f32 %v136, %v194
    %v196 = vpop.f32.mrf.mxu0
    %v197 = vadd.f32 %v136, %v196
    %198 = vdwg.mxu0
    %v199 = vadd.f32 %v62, %v195
    %v200 = vadd.f32 %v63, %v197
    %v201 = vpack.c.bf16 %v199, %v199
    %v202 = vpack.c.bf16 %v200, %v200
    %203 = vst [vmem:[#allocation8] sm:$0xf] %v201
    %204 = vst [vmem:[#allocation8 + $0x4] sm:$0xf] %v202
    // Predicated region
    $region26: #{tpu_custom_call.1} parent=1 // pred_check
      _
    $region27: #{tpu_custom_call.1} parent=1 // pred_check_branch
      %206 = sbr.rel (0) target = $region29
    $region28: #{tpu_custom_call.1} parent=1 // pred_region
      %208 = vsyncadd [#allocation4], 0
      %s209 = sshll.u32 [#allocation8], 4
      %s210 = int_to_ptr.vmem [resolvable:$true] %s209
      %s211 = sshll.u32 %s3, 4
      %s212 = int_to_ptr.hbm [resolvable:$true] %s211
      %217 = dma.vmem_to_hbm [thread:$0]  %s210, 128, %s212, [#allocation4], 64, 64, 4
    $region29: #{tpu_custom_call.1} parent=1 // pred_fallthru
      _
    // Predicated region
    $region30: #{tpu_custom_call.1} parent=1 // pred_check
      _
    $region31: #{tpu_custom_call.1} parent=1 // pred_check_branch
      %219 = sbr.rel (0) target = $region33
    $region32: #{tpu_custom_call.1} parent=1 // pred_region
      %221 = dma.done [#allocation4], 128
    $region33: #{tpu_custom_call.1} parent=1 // pred_fallthru
      _
    %222 = vsyncpa [#allocation3], 1
    %223 = vsyncpa [#allocation6], 1
    %224 = vsyncpa [#allocation4], 1

</llo_original>
